<compile_context>
chip_gen: v5e
topology: v5e:2x2
jax: 0.10.0
libtpu: 0.0.40
codegen_flags: <defaults>
</compile_context>

<pallas_src>
import jax
import jax.numpy as jnp
from jax.experimental import pallas as pl
from jax.experimental.pallas import tpu as pltpu

_LANES = 128


def _clone_views_kernel(x_ref, o_ref):
    # z = relu(x) * (relu(x) + 3). The in-place add_ only mutates the clone,
    # so y itself stays relu(x). Weak-typed Python literals keep bf16 inputs
    # in bf16 (half the HBM bytes).
    y = jnp.maximum(x_ref[...], 0.0)
    o_ref[...] = y * (y + 3.0)


def module_with_necessary_clone_and_views(x: jax.Array) -> jax.Array:
    """Elementwise z = relu(x) * (relu(x) + 3), same shape/dtype as x."""
    orig_shape = x.shape
    dtype = x.dtype
    total = x.size
    itemsize = jnp.dtype(dtype).itemsize

    # Sublane packing per vreg: 8 rows for 32-bit, 16 for 16-bit, 32 for 8-bit.
    sublane = {4: 8, 2: 16, 1: 32}.get(itemsize, 8)

    # Lane-dense (rows, 128) slab; pad so rows is a multiple of the sublane
    # count (full vregs, unmasked stores, legal (8k,128) block shapes).
    flat = x.reshape(-1)
    chunk = sublane * _LANES
    padded_total = ((total + chunk - 1) // chunk) * chunk
    if padded_total != total:
        flat = jnp.pad(flat, (0, padded_total - total))
    rows = padded_total // _LANES
    x2d = flat.reshape(rows, _LANES)

    # ---- Tile sizing --------------------------------------------------------
    # Target ~4 MiB per block: with input + output both double-buffered that is
    # ~16 MiB of VMEM, comfortably inside every generation's scoped limit while
    # big enough to sit at ~85%+ of the HBM roofline.
    bytes_per_row = _LANES * itemsize
    target_block_bytes = 4 << 20
    max_block_rows = max(
        sublane, (target_block_bytes // bytes_per_row) // sublane * sublane
    )

    if rows <= max_block_rows:
        block_rows = rows  # single block covers the (padded) array
    else:
        block_rows = max_block_rows
        # Keep >= 8 grid steps on big inputs so the "parallel" axis can shard
        # across v7x's 2 TensorCores, but never shrink blocks below ~512 KiB
        # (per-step pipeline overhead would start to show again).
        min_steps = 8
        min_block_rows = max(
            sublane, ((512 << 10) // bytes_per_row) // sublane * sublane
        )
        while (
            pl.cdiv(rows, block_rows) < min_steps
            and (block_rows // 2) >= min_block_rows
        ):
            block_rows = max(sublane, (block_rows // 2) // sublane * sublane)

    grid = (pl.cdiv(rows, block_rows),)

    out2d = pl.pallas_call(
        _clone_views_kernel,
        out_shape=jax.ShapeDtypeStruct((rows, _LANES), dtype),
        grid_spec=pltpu.PrefetchScalarGridSpec(
            num_scalar_prefetch=0,
            grid=grid,
            in_specs=[pl.BlockSpec((block_rows, _LANES), lambda i: (i, 0))],
            out_specs=pl.BlockSpec((block_rows, _LANES), lambda i: (i, 0)),
        ),
        compiler_params=pltpu.CompilerParams(
            dimension_semantics=("parallel",),
            vmem_limit_bytes=48 << 20,  # headroom under v7x's 64 MiB physical VMEM
        ),
        cost_estimate=pl.CostEstimate(
            flops=3 * padded_total,
            transcendentals=0,
            bytes_accessed=2 * padded_total * itemsize,
        ),
    )(x2d)

    out_flat = out2d.reshape(-1)
    if padded_total != total:
        out_flat = out_flat[:total]
    return out_flat.reshape(orig_shape)


if __name__ == "__main__":
    key = jax.random.PRNGKey(0)

    # Small NCHW input consistent with the module (elementwise -> any shape).
    x = jax.random.normal(key, (2, 4, 16, 16), dtype=jnp.float32)
    z = module_with_necessary_clone_and_views(x)
    jax.block_until_ready(z)

    y_ref = jnp.maximum(x, 0.0)
    z_ref = y_ref * (y_ref + 3.0)
    assert z.shape == x.shape and z.dtype == x.dtype
    assert jnp.allclose(z, z_ref, atol=1e-6, rtol=1e-6)

    # Exercise the non-128-divisible padding path as well.
    k2 = jax.random.PRNGKey(1)
    x_odd = jax.random.normal(k2, (3, 5, 7, 9), dtype=jnp.float32)
    z_odd = module_with_necessary_clone_and_views(x_odd)
    jax.block_until_ready(z_odd)
    y_odd = jnp.maximum(x_odd, 0.0)
    assert z_odd.shape == x_odd.shape and z_odd.dtype == x_odd.dtype
    assert jnp.allclose(z_odd, y_odd * (y_odd + 3.0), atol=1e-6, rtol=1e-6)

    print("KERNEL_OK")
</pallas_src>

<mosaic_0001>
module attributes {stable_mosaic.version = 11 : i64} {
  func.func @_clone_views_kernel(%arg0: i32, %arg1: memref<16x128xf32, #tpu.memory_space<vmem>>, %arg2: memref<16x128xf32, #tpu.memory_space<vmem>>) attributes {dimension_semantics = [#tpu.dimension_semantics<parallel>], iteration_bounds = array<i64: 1>, scalar_prefetch = 0 : i64, scratch_operands = 0 : i64, tpu.core_type = #tpu.core_type<tc>, window_params = [{transform_indices = @transform_0, window_bounds = array<i64: 16, 128>}, {transform_indices = @transform_1, window_bounds = array<i64: 16, 128>}]} {
    %c0 = arith.constant 0 : index
    %c0_0 = arith.constant 0 : index
    %0 = vector.load %arg1[%c0, %c0_0] : memref<16x128xf32, #tpu.memory_space<vmem>>, vector<16x128xf32>
    %cst = arith.constant 0.000000e+00 : f32
    %1 = vector.broadcast %cst : f32 to vector<16x128xf32>
    %2 = arith.maximumf %0, %1 : vector<16x128xf32>
    %cst_1 = arith.constant 3.000000e+00 : f32
    %3 = vector.broadcast %cst_1 : f32 to vector<16x128xf32>
    %4 = arith.addf %2, %3 : vector<16x128xf32>
    %5 = arith.mulf %2, %4 : vector<16x128xf32>
    %c0_2 = arith.constant 0 : index
    %c0_3 = arith.constant 0 : index
    %6 = vector.load %arg2[%c0_2, %c0_3] : memref<16x128xf32, #tpu.memory_space<vmem>>, vector<16x128xf32>
    tpu.vector_store %arg2[%c0_2, %c0_3], %5 {strides = array<i32>} : memref<16x128xf32, #tpu.memory_space<vmem>>, vector<16x128xf32>,
    return
  }
  func.func @transform_0(%arg0: i32) -> (i32, i32) {
    %c0_i32 = arith.constant 0 : i32
    %c0_i32_0 = arith.constant 0 : i32
    return %arg0, %c0_i32 : i32, i32
  }
  func.func @transform_1(%arg0: i32) -> (i32, i32) {
    %c0_i32 = arith.constant 0 : i32
    %c0_i32_0 = arith.constant 0 : i32
    return %arg0, %c0_i32 : i32, i32
  }
}

</mosaic_0001>

<llo_original>
// kernel: tpu_custom_call.1
$region0: #{tpu_custom_call.1}
  #allocation0 [shape = 'u32[]', space=smem, size = 0x4, offset = 0x4, fixed_abs, tag = 'smem constant byte address 0x4 - core index']
  #allocation1 [shape = 'u32[72,128]{1,0:T(1,128)}', space=vmem, size = 0x9000, scoped, tag = 'internal scratch']
  %s0 = inlined_call_operand.hbm [shape: f32[16,128], index: 0, kind: input, shape index: {}]
  %s1 = inlined_call_operand.hbm [shape: f32[16,128], index: 1, kind: output, shape index: {}]
  %s2 = sld [smem:[#allocation0]]
  $region18: #{tpu_custom_call.1} parent=0
    _
  %s4 = ssub.s32 1, %s2
  %s5 = scalar_select 0, %s4, %s2
  $region1: #{tpu_custom_call.1} parent=0
    #allocation2 [shape = 'u8[8192]{0}', space=vmem, size = 0x2000, scoped, tag = 'input window, operand 0, single buffered']
    #allocation3 [shape = 's32[1]{0}', space=sflag, size = 0x4, scoped, tag = 'scoped memory for tpu_custom_call.1']
    #allocation4 [shape = 's32[1]{0}', space=sflag, size = 0x4, scoped, tag = 'scoped memory for tpu_custom_call.1']
    #allocation5 [shape = 'u8[8192]{0}', space=vmem, size = 0x2000, scoped, tag = 'output window, operand 0, single buffered']
    %6 = vsyncpa [#allocation3], 0
    %7 = vsyncpa [#allocation4], 0
    // Predicated region
    $region2: #{tpu_custom_call.1} parent=1 // pred_check
      _
    $region3: #{tpu_custom_call.1} parent=1 // pred_check_branch
      %9 = sbr.rel (0) target = $region5
    $region4: #{tpu_custom_call.1} parent=1 // pred_region
      %11 = vsyncadd [#allocation3], 0
      %s12 = sshll.u32 %s0, 4
      %s13 = int_to_ptr.hbm [resolvable:$true] %s12
      %s14 = sshll.u32 [#allocation2], 4
      %s15 = int_to_ptr.vmem [resolvable:$true] %s14
      %20 = dma.hbm_to_vmem [thread:$0]  %s13, 256, %s15, [#allocation3], 128, 128, 8
    $region5: #{tpu_custom_call.1} parent=1 // pred_fallthru
      _
    // Predicated region
    $region6: #{tpu_custom_call.1} parent=1 // pred_check
      _
    $region7: #{tpu_custom_call.1} parent=1 // pred_check_branch
      %22 = sbr.rel (0) target = $region9
    $region8: #{tpu_custom_call.1} parent=1 // pred_region
      %24 = dma.done [#allocation3], 256
    $region9: #{tpu_custom_call.1} parent=1 // pred_fallthru
      _
    %v25 = vld [vmem:[#allocation2] sm:$0xff]
    %v26 = vld [vmem:[#allocation2 + $0x8] sm:$0xff]
    %v27 = vmax.f32 %v25, 0.0
    %v28 = vmax.f32 %v26, 0.0
    %v29 = vadd.f32 %v27, 3.0
    %v30 = vadd.f32 %v28, 3.0
    %v31 = vmul.f32 %v27, %v29
    %v32 = vmul.f32 %v28, %v30
    %33 = vst [vmem:[#allocation5] sm:$0xff] %v31
    %34 = vst [vmem:[#allocation5 + $0x8] sm:$0xff] %v32
    // Predicated region
    $region10: #{tpu_custom_call.1} parent=1 // pred_check
      _
    $region11: #{tpu_custom_call.1} parent=1 // pred_check_branch
      %36 = sbr.rel (0) target = $region13
    $region12: #{tpu_custom_call.1} parent=1 // pred_region
      %38 = vsyncadd [#allocation4], 0
      %s39 = sshll.u32 [#allocation5], 4
      %s40 = int_to_ptr.vmem [resolvable:$true] %s39
      %s41 = sshll.u32 %s1, 4
      %s42 = int_to_ptr.hbm [resolvable:$true] %s41
      %47 = dma.vmem_to_hbm [thread:$0]  %s40, 256, %s42, [#allocation4], 128, 128, 8
    $region13: #{tpu_custom_call.1} parent=1 // pred_fallthru
      _
    // Predicated region
    $region14: #{tpu_custom_call.1} parent=1 // pred_check
      _
    $region15: #{tpu_custom_call.1} parent=1 // pred_check_branch
      %49 = sbr.rel (0) target = $region17
    $region16: #{tpu_custom_call.1} parent=1 // pred_region
      %51 = dma.done [#allocation4], 256
    $region17: #{tpu_custom_call.1} parent=1 // pred_fallthru
      _
    %52 = vsyncpa [#allocation3], 1
    %53 = vsyncpa [#allocation4], 1

</llo_original>
